<compile_context>
chip_gen: v7x
topology: tpu7x:2x2x1
jax: 0.10.0
libtpu: 0.0.40
codegen_flags: <defaults>
</compile_context>

<pallas_src>
import functools
import math

import jax
import jax.numpy as jnp
from jax.experimental import pallas as pl
from jax.experimental.pallas import tpu as pltpu


# ----------------------------------------------------------------------------
# Kernels (one grid step handles a (TILE_B, N) row-tile of the flattened slab)
# ----------------------------------------------------------------------------
def _posenc_kernel(x_ref, pe_ref, o_ref):
    # (TILE_B, N) + (1, N) broadcast add, computed in f32, stored in out dtype.
    y = x_ref[...].astype(jnp.float32) + pe_ref[...].astype(jnp.float32)
    o_ref[...] = y.astype(o_ref.dtype)


def _posenc_dropout_kernel(x_ref, pe_ref, keep_ref, o_ref, *, scale):
    y = x_ref[...].astype(jnp.float32) + pe_ref[...].astype(jnp.float32)
    keep = keep_ref[...]                       # 0.0 / 1.0 mask
    o_ref[...] = jnp.where(keep != 0.0, y * scale, 0.0).astype(o_ref.dtype)


# ----------------------------------------------------------------------------
# pe buffer (mirrors the PyTorch register_buffer construction).
# ----------------------------------------------------------------------------
def make_positional_encoding_table(max_len, d_model):
    position = jnp.arange(max_len, dtype=jnp.float32)[:, None]
    div_term = jnp.exp(jnp.arange(0, d_model, 2, dtype=jnp.float32)
                       * (-math.log(10000.0) / d_model))
    pe = jnp.zeros((max_len, d_model), jnp.float32)
    pe = pe.at[:, 0::2].set(jnp.sin(position * div_term))
    pe = pe.at[:, 1::2].set(jnp.cos(position * div_term))
    return pe


def _choose_tile_rows(n_rows, n_cols, itemsize, target_bytes=512 << 10):
    """Rows per block: ~512 KiB per input tile, multiple of 8 when possible."""
    if n_rows <= 8:
        return n_rows                      # block == full sublane extent (legal)
    target = max(8, target_bytes // max(1, n_cols * itemsize))
    target = max(8, (target // 8) * 8)     # multiple of 8 rows
    return int(min(target, (n_rows // 8) * 8))


# ----------------------------------------------------------------------------
# Wrapper: flatten (B, T, D) -> lane-dense (B, T*D), tiled fused pallas_call.
# ----------------------------------------------------------------------------
def positional_encoding_pallas(x, pe, *, dropout_p=0.1, training=False,
                               rng_key=None):
    B, T, D = x.shape
    N = T * D
    x2 = x.reshape(B, N)                         # contiguous reshape (layout no-op)
    pe2 = pe[:T].reshape(1, N).astype(jnp.float32)

    tile_b = _choose_tile_rows(B, N, x2.dtype.itemsize)
    grid = (pl.cdiv(B, tile_b),)

    x_spec = pl.BlockSpec((tile_b, N), lambda i: (i, 0))
    pe_spec = pl.BlockSpec((1, N), lambda i: (0, 0))       # resident across steps
    out_spec = pl.BlockSpec((tile_b, N), lambda i: (i, 0))

    apply_dropout = bool(training) and float(dropout_p) > 0.0
    if apply_dropout:
        if rng_key is None:
            rng_key = jax.random.PRNGKey(0)
        keep = jax.random.bernoulli(
            rng_key, 1.0 - float(dropout_p), (B, N)).astype(jnp.float32)
        kernel = functools.partial(_posenc_dropout_kernel,
                                   scale=1.0 / (1.0 - float(dropout_p)))
        in_specs = [x_spec, pe_spec,
                    pl.BlockSpec((tile_b, N), lambda i: (i, 0))]
        args = (x2, pe2, keep)
    else:
        kernel = _posenc_kernel
        in_specs = [x_spec, pe_spec]
        args = (x2, pe2)

    out = pl.pallas_call(
        kernel,
        out_shape=jax.ShapeDtypeStruct((B, N), x.dtype),
        grid_spec=pltpu.PrefetchScalarGridSpec(
            num_scalar_prefetch=0,
            grid=grid,
            in_specs=in_specs,
            out_specs=out_spec,
        ),
        compiler_params=pltpu.CompilerParams(
            dimension_semantics=("parallel",)),
    )(*args)
    return out.reshape(B, T, D)


# ----------------------------------------------------------------------------
# Pure-JAX reference (eval mode: dropout == identity).
# ----------------------------------------------------------------------------
def positional_encoding_ref(x, pe):
    return x + pe[None, :x.shape[1], :]


if __name__ == "__main__":
    # d_model=32, seq=8, batch=2, dropout p=0.1
    B, T, D = 2, 8, 32
    MAX_LEN, P = 64, 0.1

    key = jax.random.PRNGKey(0)
    kx, kdrop = jax.random.split(key)
    x = jax.random.normal(kx, (B, T, D), jnp.float32)
    pe = make_positional_encoding_table(MAX_LEN, D)
    ref = positional_encoding_ref(x, pe)

    # eval mode (dropout identity): exact check against the reference.
    out = jax.block_until_ready(
        positional_encoding_pallas(x, pe, dropout_p=P, training=False))
    assert out.shape == (B, T, D), out.shape
    assert jnp.allclose(out, ref, atol=1e-5, rtol=1e-5), float(
        jnp.max(jnp.abs(out - ref)))

    # training mode: the wrapper derives the keep-mask from rng_key, so the
    # expected output can be reconstructed exactly here.
    out_t = jax.block_until_ready(
        positional_encoding_pallas(x, pe, dropout_p=P, training=True,
                                   rng_key=kdrop))
    keep = jax.random.bernoulli(kdrop, 1.0 - P, (B, T * D)).astype(
        jnp.float32).reshape(B, T, D)
    expected_t = jnp.where(keep != 0.0, ref * (1.0 / (1.0 - P)), 0.0)
    assert jnp.allclose(out_t, expected_t, atol=1e-5, rtol=1e-5), float(
        jnp.max(jnp.abs(out_t - expected_t)))

    # larger batch: exercises the multi-step "parallel" grid with 8-row tiles.
    B2 = 1024
    x_big = jax.random.normal(jax.random.PRNGKey(1), (B2, T, D), jnp.float32)
    out_big = jax.block_until_ready(
        positional_encoding_pallas(x_big, pe, dropout_p=P, training=False))
    ref_big = positional_encoding_ref(x_big, pe)
    assert jnp.allclose(out_big, ref_big, atol=1e-5, rtol=1e-5)

    print("KERNEL_OK")
</pallas_src>

<mosaic_0001>
module attributes {stable_mosaic.version = 11 : i64} {
  func.func @_posenc_kernel(%arg0: i32, %arg1: memref<2x256xf32, #tpu.memory_space<vmem>>, %arg2: memref<1x256xf32, #tpu.memory_space<vmem>>, %arg3: memref<2x256xf32, #tpu.memory_space<vmem>>) attributes {dimension_semantics = [#tpu.dimension_semantics<parallel>], iteration_bounds = array<i64: 1>, scalar_prefetch = 0 : i64, scratch_operands = 0 : i64, tpu.core_type = #tpu.core_type<tc>, window_params = [{transform_indices = @transform_0, window_bounds = array<i64: 2, 256>}, {pipeline_mode = #tpu.pipeline_mode<synchronous>, transform_indices = @transform_1, window_bounds = array<i64: 1, 256>}, {transform_indices = @transform_2, window_bounds = array<i64: 2, 256>}]} {
    %c0 = arith.constant 0 : index
    %c0_0 = arith.constant 0 : index
    %0 = vector.load %arg1[%c0, %c0_0] : memref<2x256xf32, #tpu.memory_space<vmem>>, vector<2x256xf32>
    %c0_1 = arith.constant 0 : index
    %c0_2 = arith.constant 0 : index
    %1 = vector.load %arg2[%c0_1, %c0_2] : memref<1x256xf32, #tpu.memory_space<vmem>>, vector<1x256xf32>
    %2 = vector.broadcast %1 : vector<1x256xf32> to vector<2x256xf32>
    %3 = arith.addf %0, %2 : vector<2x256xf32>
    %c0_3 = arith.constant 0 : index
    %c0_4 = arith.constant 0 : index
    %4 = vector.load %arg3[%c0_3, %c0_4] : memref<2x256xf32, #tpu.memory_space<vmem>>, vector<2x256xf32>
    tpu.vector_store %arg3[%c0_3, %c0_4], %3 {strides = array<i32>} : memref<2x256xf32, #tpu.memory_space<vmem>>, vector<2x256xf32>,
    return
  }
  func.func @transform_0(%arg0: i32) -> (i32, i32) {
    %c0_i32 = arith.constant 0 : i32
    %c0_i32_0 = arith.constant 0 : i32
    return %arg0, %c0_i32 : i32, i32
  }
  func.func @transform_1(%arg0: i32) -> (i32, i32) {
    %c0_i32 = arith.constant 0 : i32
    %c0_i32_0 = arith.constant 0 : i32
    %c0_i32_1 = arith.constant 0 : i32
    return %c0_i32, %c0_i32_0 : i32, i32
  }
  func.func @transform_2(%arg0: i32) -> (i32, i32) {
    %c0_i32 = arith.constant 0 : i32
    %c0_i32_0 = arith.constant 0 : i32
    return %arg0, %c0_i32 : i32, i32
  }
}

</mosaic_0001>

<llo_original>
// kernel: tpu_custom_call.1
$region0: #{tpu_custom_call.1}
  #allocation0 [shape = 'u32[]', space=smem, size = 0x4, offset = 0x4, fixed_abs, tag = 'smem constant byte address 0x4 - core index']
  #allocation1 [shape = 'u32[144,128]{1,0:T(1,128)}', space=vmem, size = 0x12000, scoped, tag = 'internal scratch']
  %s0 = inlined_call_operand.hbm [shape: f32[2,256], index: 0, kind: input, shape index: {}]
  %s1 = inlined_call_operand.vmem [shape: f32[1,256], index: 1, kind: input, shape index: {}]
  %s2 = inlined_call_operand.hbm [shape: f32[2,256], index: 2, kind: output, shape index: {}]
  %s3 = sld [smem:[#allocation0]]
  $region22: #{tpu_custom_call.1} parent=0
    _
  %s5 = ssub.s32 1, %s3
  %s6 = scalar_select 0, %s5, %s3
  $region1: #{tpu_custom_call.1} parent=0
    #allocation2 [shape = 'u8[2048]{0}', space=vmem, size = 0x800, scoped, tag = 'input window, operand 0, single buffered']
    #allocation3 [shape = 's32[1]{0}', space=sflag, size = 0x4, scoped, tag = 'scoped memory for tpu_custom_call.1']
    #allocation4 [shape = 's32[1]{0}', space=sflag, size = 0x4, scoped, tag = 'scoped memory for tpu_custom_call.1']
    #allocation5 [shape = 'u8[2048]{0}', space=vmem, size = 0x800, scoped, tag = 'output window, operand 0, single buffered']
    %7 = vsyncpa [#allocation3], 0
    %8 = vsyncpa [#allocation4], 0
    // Predicated region
    $region2: #{tpu_custom_call.1} parent=1 // pred_check
      _
    $region3: #{tpu_custom_call.1} parent=1 // pred_check_branch
      %10 = sbr.rel (0) target = $region5
    $region4: #{tpu_custom_call.1} parent=1 // pred_region
      %s12 = ssub.s32 64, 64
      %13 = vsyncadd [#allocation3], %s12
      %s15 = sshll.u32 [#allocation2], 4
      %s16 = int_to_ptr.vmem [resolvable:$true] %s15
      %18 = dma.hbm_to_vmem [thread:$0]  %s0, 64, %s16, [#allocation3]
    $region5: #{tpu_custom_call.1} parent=1 // pred_fallthru
      _
    // Predicated region
    $region6: #{tpu_custom_call.1} parent=1 // pred_check
      _
    $region7: #{tpu_custom_call.1} parent=1 // pred_check_branch
      %20 = sbr.rel (0) target = $region9
    $region8: #{tpu_custom_call.1} parent=1 // pred_region
      _
    $region9: #{tpu_custom_call.1} parent=1 // pred_fallthru
      _
    // Predicated region
    $region10: #{tpu_custom_call.1} parent=1 // pred_check
      _
    $region11: #{tpu_custom_call.1} parent=1 // pred_check_branch
      %22 = sbr.rel (0) target = $region13
    $region12: #{tpu_custom_call.1} parent=1 // pred_region
      %23 = dma.done [#allocation3], 64
    $region13: #{tpu_custom_call.1} parent=1 // pred_fallthru
      _
    %v24 = vld [vmem:[#allocation2] sm:$0xf]
    %v25 = vld [vmem:[%s1] sm:$0x3]
    %v27 = vlaneseq
    %v28 = vshrl.u32 %v27, 7
    %v29 = vsub.s32 0, %v28
    %v30 = vrot.slane %v25, %v29
    %v31 = vlaneseq
    %v32 = vshrl.u32 %v31, 7
    %v33 = vsub.s32 1, %v32
    %v34 = vrot.slane %v25, %v33
    %v35 = vcombine.low %v30, %v34
    %v37 = vunpack.c.l.s4 1983009808
    %v38 = vunpack.c.0.s8 %v37
    %v39 = vlaneseq
    %v40 = vshrl.u32 %v39, 7
    %v41 = vsub.s32 %v38, %v40
    %v42 = vrot.slane %v35, %v41
    %v44 = vadd.f32 %v24, %v42
    %45 = vst [vmem:[#allocation5] sm:$0xf] %v44
    // Predicated region
    $region14: #{tpu_custom_call.1} parent=1 // pred_check
      _
    $region15: #{tpu_custom_call.1} parent=1 // pred_check_branch
      %47 = sbr.rel (0) target = $region17
    $region16: #{tpu_custom_call.1} parent=1 // pred_region
      %s49 = ssub.s32 64, 64
      %50 = vsyncadd [#allocation4], %s49
      %s52 = sshll.u32 [#allocation5], 4
      %s53 = int_to_ptr.vmem [resolvable:$true] %s52
      %55 = dma.vmem_to_hbm [thread:$0]  %s53, 64, %s2, [#allocation4]
    $region17: #{tpu_custom_call.1} parent=1 // pred_fallthru
      _
    // Predicated region
    $region18: #{tpu_custom_call.1} parent=1 // pred_check
      _
    $region19: #{tpu_custom_call.1} parent=1 // pred_check_branch
      %57 = sbr.rel (0) target = $region21
    $region20: #{tpu_custom_call.1} parent=1 // pred_region
      %58 = dma.done [#allocation4], 64
    $region21: #{tpu_custom_call.1} parent=1 // pred_fallthru
      _
    %59 = vsyncpa [#allocation3], 1
    %60 = vsyncpa [#allocation4], 1

</llo_original>
